<compile_context>
chip_gen: v7x
topology: tpu7x:2x2x1
jax: 0.10.0
libtpu: 0.0.40
codegen_flags: <defaults>
</compile_context>

<pallas_src>
import functools

import jax
import jax.numpy as jnp
from jax.experimental import pallas as pl
from jax.experimental.pallas import tpu as pltpu


def _focal_ce_kernel(logits_ref, labels_ref, sum_ref, cnt_ref, *, ignore_index):
    """Masked sum of log p_target and valid-pixel count, accumulated over the
    trailing pixel-tile grid axis.

    logits_ref: (C, TILE) float VMEM   -- classes on sublanes, pixels on lanes
    labels_ref: (1, TILE) int32 VMEM
    sum_ref:    (8, 128) float32 VMEM  -- resident accumulator (broadcast scalar)
    cnt_ref:    (8, 128) float32 VMEM
    """
    j = pl.program_id(2)

    @pl.when(j == 0)
    def _():
        sum_ref[...] = jnp.zeros_like(sum_ref)
        cnt_ref[...] = jnp.zeros_like(cnt_ref)

    x = logits_ref[...].astype(jnp.float32)                      # (C, T)
    labels = labels_ref[...]                                     # (1, T)

    # numerically stable log-sum-exp over the class (sublane) axis
    m = jnp.max(x, axis=0, keepdims=True)                        # (1, T)
    z = x - m                                                    # (C, T)
    lse = jnp.log(jnp.sum(jnp.exp(z), axis=0, keepdims=True))    # (1, T)

    # fused gather of z at the target class (no one-hot f32 materialization)
    cls = jax.lax.broadcasted_iota(jnp.int32, x.shape, 0)        # (C, T)
    z_t = jnp.sum(jnp.where(cls == labels, z, 0.0),
                  axis=0, keepdims=True)                         # (1, T)
    logpt = z_t - lse                                            # (1, T)

    valid = (labels != ignore_index).astype(jnp.float32)         # (1, T)

    tile_sum = jnp.sum(logpt * valid, axis=1, keepdims=True)     # (1, 1)
    tile_cnt = jnp.sum(valid, axis=1, keepdims=True)             # (1, 1)

    sum_ref[...] += jnp.broadcast_to(tile_sum, sum_ref.shape)
    cnt_ref[...] += jnp.broadcast_to(tile_cnt, cnt_ref.shape)


def _select_tile(C, HW, itemsize, pixel_splits, vmem_budget_bytes, max_tile):
    """Largest multiple of 128 whose per-step VMEM footprint fits the budget.

    Per pixel per step: 2x double-buffered logits column (C * itemsize each),
    ~6 f32 (C,) temporaries (x, z, exp(z), iota, where, product), plus labels.
    Budget default (8 MiB) stays well under v5e's 16 MiB default scoped VMEM.
    """
    per_pixel_bytes = C * (2 * itemsize + 6 * 4) + 16
    tile = vmem_budget_bytes // per_pixel_bytes
    # never tile beyond what one pixel-split actually needs
    per_split = -(-HW // pixel_splits)
    per_split = ((per_split + 127) // 128) * 128
    tile = min(tile, max_tile, per_split)
    tile = max(128, (tile // 128) * 128)
    return int(tile)


def focal_loss(logits_nchw, labels, alpha=0.25, gamma=1.6, ignore_index=6,
               pixel_splits=2, vmem_budget_bytes=8 << 20, max_tile_hw=32768):
    """Matches FocalLoss.forward: CE is mean over non-ignored pixels."""
    N, C, H, W = logits_nchw.shape
    HW = H * W

    # Free reshape of the native NCHW layout (no transpose, no copy).
    x = logits_nchw.reshape(N, C, HW)
    lab = labels.reshape(N, 1, HW).astype(jnp.int32)

    P = max(1, int(pixel_splits))
    tile = _select_tile(C, HW, x.dtype.itemsize, P, vmem_budget_bytes,
                        max_tile_hw)
    gj = -(-HW // (P * tile))          # pixel tiles per split
    HW_pad = P * gj * tile

    # Pad the pixel (lane) axis up to a multiple of the chosen tile.  Padded
    # labels carry ignore_index so they contribute nothing; padded logits are
    # zeros so everything stays finite.
    if HW_pad != HW:
        x = jnp.pad(x, ((0, 0), (0, 0), (0, HW_pad - HW)))
        lab = jnp.pad(lab, ((0, 0), (0, 0), (0, HW_pad - HW)),
                      constant_values=ignore_index)

    kernel = functools.partial(_focal_ce_kernel, ignore_index=ignore_index)

    sum_out, cnt_out = pl.pallas_call(
        kernel,
        grid=(N, P, gj),
        in_specs=[
            # logits: all classes on sublanes, one tile of pixels on lanes
            pl.BlockSpec((None, C, tile), lambda n, p, j: (n, 0, p * gj + j)),
            # labels: lane-dense row of pixel labels
            pl.BlockSpec((None, 1, tile), lambda n, p, j: (n, 0, p * gj + j)),
        ],
        out_specs=(
            # one resident accumulator block per (image, split); same block
            # across the trailing "arbitrary" pixel axis
            pl.BlockSpec((None, None, 8, 128), lambda n, p, j: (n, p, 0, 0)),
            pl.BlockSpec((None, None, 8, 128), lambda n, p, j: (n, p, 0, 0)),
        ),
        out_shape=(
            jax.ShapeDtypeStruct((N, P, 8, 128), jnp.float32),
            jax.ShapeDtypeStruct((N, P, 8, 128), jnp.float32),
        ),
        compiler_params=pltpu.CompilerParams(
            dimension_semantics=("parallel", "parallel", "arbitrary")),
    )(x, lab)

    # Tiny final reduce over the N*P per-accumulator scalars.
    sum_logpt = jnp.sum(sum_out[:, :, 0, 0])
    cnt = jnp.sum(cnt_out[:, :, 0, 0])

    # Scalar glue identical to the PyTorch module (clamp guards fp rounding).
    ce = -(sum_logpt / cnt)                       # nn.CrossEntropyLoss value
    log_pt = -ce
    one_minus_pt = jnp.maximum(1.0 - jnp.exp(log_pt), 0.0)
    loss = -(one_minus_pt ** gamma) * alpha * log_pt
    return loss


def _focal_loss_ref(logits_nchw, labels, alpha=0.25, gamma=1.6, ignore_index=6):
    """Pure-JAX reference for correctness checking."""
    N, C, H, W = logits_nchw.shape
    x = jnp.transpose(logits_nchw, (0, 2, 3, 1)).reshape(-1, C).astype(jnp.float32)
    lab = labels.reshape(-1).astype(jnp.int32)
    logp = jax.nn.log_softmax(x, axis=-1)
    logpt = jnp.take_along_axis(logp, lab[:, None], axis=-1)[:, 0]
    valid = (lab != ignore_index).astype(jnp.float32)
    ce = -jnp.sum(logpt * valid) / jnp.sum(valid)
    log_pt = -ce
    one_minus_pt = jnp.maximum(1.0 - jnp.exp(log_pt), 0.0)
    return -(one_minus_pt ** gamma) * alpha * log_pt


if __name__ == "__main__":
    key = jax.random.PRNGKey(0)
    k1, k2, k3, k4 = jax.random.split(key, 4)

    # segmentation-style shapes: batch=2, 7 classes (class 6 = ignore), 16x16
    N, C, H, W = 2, 7, 16, 16
    logits = jax.random.normal(k1, (N, C, H, W), dtype=jnp.float32)
    labels = jax.random.randint(k2, (N, H, W), 0, C, dtype=jnp.int32)

    out = focal_loss(logits, labels)
    out = jax.block_until_ready(out)
    ref = _focal_loss_ref(logits, labels)
    assert jnp.allclose(out, ref, rtol=1e-5, atol=1e-5), (out, ref)

    # awkward (non multiple-of-128) spatial size exercises the padding path
    N2, H2, W2 = 1, 30, 25
    logits2 = jax.random.normal(k3, (N2, C, H2, W2), dtype=jnp.float32)
    labels2 = jax.random.randint(k4, (N2, H2, W2), 0, C, dtype=jnp.int32)

    out2 = focal_loss(logits2, labels2)
    out2 = jax.block_until_ready(out2)
    ref2 = _focal_loss_ref(logits2, labels2)
    assert jnp.allclose(out2, ref2, rtol=1e-5, atol=1e-5), (out2, ref2)

    print("KERNEL_OK")
</pallas_src>

<mosaic_0001>
module attributes {stable_mosaic.version = 11 : i64} {
  func.func @_focal_ce_kernel(%arg0: i32, %arg1: i32, %arg2: i32, %arg3: memref<1x7x128xf32, #tpu.memory_space<vmem>>, %arg4: memref<1x1x128xi32, #tpu.memory_space<vmem>>, %arg5: memref<1x1x8x128xf32, #tpu.memory_space<vmem>>, %arg6: memref<1x1x8x128xf32, #tpu.memory_space<vmem>>) attributes {dimension_semantics = [#tpu.dimension_semantics<parallel>, #tpu.dimension_semantics<parallel>, #tpu.dimension_semantics<arbitrary>], iteration_bounds = array<i64: 2, 2, 1>, scalar_prefetch = 0 : i64, scratch_operands = 0 : i64, tpu.core_type = #tpu.core_type<tc>, window_params = [{transform_indices = @transform_0, window_bounds = array<i64: 1, 7, 128>}, {transform_indices = @transform_1, window_bounds = array<i64: 1, 1, 128>}, {transform_indices = @transform_2, window_bounds = array<i64: 1, 1, 8, 128>}, {transform_indices = @transform_3, window_bounds = array<i64: 1, 1, 8, 128>}]} {
    %c0_i32 = arith.constant 0 : i32
    %0 = arith.cmpi eq, %arg2, %c0_i32 : i32
    %1 = arith.extui %0 : i1 to i32
    %c0_i32_0 = arith.constant 0 : i32
    %2 = arith.cmpi ne, %1, %c0_i32_0 : i32
    scf.if %2 {
      %cst_27 = arith.constant 0.000000e+00 : f32
      %48 = vector.broadcast %cst_27 : f32 to vector<8x128xf32>
      %c0_28 = arith.constant 0 : index
      %c0_29 = arith.constant 0 : index
      %c0_30 = arith.constant 0 : index
      %c0_31 = arith.constant 0 : index
      %49 = vector.load %arg5[%c0_28, %c0_29, %c0_30, %c0_31] : memref<1x1x8x128xf32, #tpu.memory_space<vmem>>, vector<1x1x8x128xf32>
      %50 = vector.shape_cast %49 : vector<1x1x8x128xf32> to vector<8x128xf32>
      %51 = vector.shape_cast %48 : vector<8x128xf32> to vector<1x1x8x128xf32>
      tpu.vector_store %arg5[%c0_28, %c0_29, %c0_30, %c0_31], %51 {strides = array<i32>} : memref<1x1x8x128xf32, #tpu.memory_space<vmem>>, vector<1x1x8x128xf32>,
      %cst_32 = arith.constant 0.000000e+00 : f32
      %52 = vector.broadcast %cst_32 : f32 to vector<8x128xf32>
      %c0_33 = arith.constant 0 : index
      %c0_34 = arith.constant 0 : index
      %c0_35 = arith.constant 0 : index
      %c0_36 = arith.constant 0 : index
      %53 = vector.load %arg6[%c0_33, %c0_34, %c0_35, %c0_36] : memref<1x1x8x128xf32, #tpu.memory_space<vmem>>, vector<1x1x8x128xf32>
      %54 = vector.shape_cast %53 : vector<1x1x8x128xf32> to vector<8x128xf32>
      %55 = vector.shape_cast %52 : vector<8x128xf32> to vector<1x1x8x128xf32>
      tpu.vector_store %arg6[%c0_33, %c0_34, %c0_35, %c0_36], %55 {strides = array<i32>} : memref<1x1x8x128xf32, #tpu.memory_space<vmem>>, vector<1x1x8x128xf32>,
    } else {
    }
    %c0 = arith.constant 0 : index
    %c0_1 = arith.constant 0 : index
    %c0_2 = arith.constant 0 : index
    %3 = vector.load %arg3[%c0, %c0_1, %c0_2] : memref<1x7x128xf32, #tpu.memory_space<vmem>>, vector<1x7x128xf32>
    %4 = vector.shape_cast %3 : vector<1x7x128xf32> to vector<7x128xf32>
    %c0_3 = arith.constant 0 : index
    %c0_4 = arith.constant 0 : index
    %c0_5 = arith.constant 0 : index
    %5 = vector.load %arg4[%c0_3, %c0_4, %c0_5] : memref<1x1x128xi32, #tpu.memory_space<vmem>>, vector<1x1x128xi32>
    %6 = vector.shape_cast %5 : vector<1x1x128xi32> to vector<1x128xi32>
    %cst = arith.constant dense<0xFF800000> : vector<128xf32>
    %7 = vector.multi_reduction <maximumf>, %4, %cst [0] : vector<7x128xf32> to vector<128xf32>
    %8 = vector.shape_cast %7 : vector<128xf32> to vector<1x128xf32>
    %9 = vector.broadcast %8 : vector<1x128xf32> to vector<7x128xf32>
    %10 = arith.subf %4, %9 : vector<7x128xf32>
    %11 = math.exp %10 : vector<7x128xf32>
    %cst_6 = arith.constant dense<0.000000e+00> : vector<128xf32>
    %12 = vector.multi_reduction <add>, %11, %cst_6 [0] : vector<7x128xf32> to vector<128xf32>
    %13 = vector.shape_cast %12 : vector<128xf32> to vector<1x128xf32>
    %14 = math.log %13 : vector<1x128xf32>
    %15 = tpu.iota {dimensions = array<i32: 0>} : vector<7x128xi32>
    %16 = vector.broadcast %6 : vector<1x128xi32> to vector<7x128xi32>
    %17 = arith.cmpi eq, %15, %16 : vector<7x128xi32>
    %cst_7 = arith.constant 0.000000e+00 : f32
    %18 = vector.broadcast %cst_7 : f32 to vector<7x128xf32>
    %19 = arith.select %17, %10, %18 : vector<7x128xi1>, vector<7x128xf32>
    %cst_8 = arith.constant dense<0.000000e+00> : vector<128xf32>
    %20 = vector.multi_reduction <add>, %19, %cst_8 [0] : vector<7x128xf32> to vector<128xf32>
    %21 = vector.shape_cast %20 : vector<128xf32> to vector<1x128xf32>
    %22 = arith.subf %21, %14 : vector<1x128xf32>
    %c6_i32 = arith.constant 6 : i32
    %23 = vector.broadcast %c6_i32 : i32 to vector<1x128xi32>
    %24 = arith.cmpi ne, %6, %23 : vector<1x128xi32>
    %25 = arith.extui %24 : vector<1x128xi1> to vector<1x128xi32>
    %26 = arith.sitofp %25 : vector<1x128xi32> to vector<1x128xf32>
    %27 = arith.mulf %22, %26 : vector<1x128xf32>
    %cst_9 = arith.constant dense<0.000000e+00> : vector<1xf32>
    %28 = vector.multi_reduction <add>, %27, %cst_9 [1] : vector<1x128xf32> to vector<1xf32>
    %29 = vector.shape_cast %28 : vector<1xf32> to vector<1x1xf32>
    %cst_10 = arith.constant dense<0.000000e+00> : vector<1xf32>
    %30 = vector.multi_reduction <add>, %26, %cst_10 [1] : vector<1x128xf32> to vector<1xf32>
    %31 = vector.shape_cast %30 : vector<1xf32> to vector<1x1xf32>
    %c0_11 = arith.constant 0 : index
    %c0_12 = arith.constant 0 : index
    %c0_13 = arith.constant 0 : index
    %c0_14 = arith.constant 0 : index
    %32 = vector.load %arg5[%c0_11, %c0_12, %c0_13, %c0_14] : memref<1x1x8x128xf32, #tpu.memory_space<vmem>>, vector<1x1x8x128xf32>
    %33 = vector.shape_cast %32 : vector<1x1x8x128xf32> to vector<8x128xf32>
    %34 = vector.shape_cast %29 : vector<1x1xf32> to vector<1x1xf32>
    %35 = vector.broadcast %34 : vector<1x1xf32> to vector<8x128xf32>
    %36 = arith.addf %33, %35 : vector<8x128xf32>
    %c0_15 = arith.constant 0 : index
    %c0_16 = arith.constant 0 : index
    %c0_17 = arith.constant 0 : index
    %c0_18 = arith.constant 0 : index
    %37 = vector.load %arg5[%c0_15, %c0_16, %c0_17, %c0_18] : memref<1x1x8x128xf32, #tpu.memory_space<vmem>>, vector<1x1x8x128xf32>
    %38 = vector.shape_cast %37 : vector<1x1x8x128xf32> to vector<8x128xf32>
    %39 = vector.shape_cast %36 : vector<8x128xf32> to vector<1x1x8x128xf32>
    tpu.vector_store %arg5[%c0_15, %c0_16, %c0_17, %c0_18], %39 {strides = array<i32>} : memref<1x1x8x128xf32, #tpu.memory_space<vmem>>, vector<1x1x8x128xf32>,
    %c0_19 = arith.constant 0 : index
    %c0_20 = arith.constant 0 : index
    %c0_21 = arith.constant 0 : index
    %c0_22 = arith.constant 0 : index
    %40 = vector.load %arg6[%c0_19, %c0_20, %c0_21, %c0_22] : memref<1x1x8x128xf32, #tpu.memory_space<vmem>>, vector<1x1x8x128xf32>
    %41 = vector.shape_cast %40 : vector<1x1x8x128xf32> to vector<8x128xf32>
    %42 = vector.shape_cast %31 : vector<1x1xf32> to vector<1x1xf32>
    %43 = vector.broadcast %42 : vector<1x1xf32> to vector<8x128xf32>
    %44 = arith.addf %41, %43 : vector<8x128xf32>
    %c0_23 = arith.constant 0 : index
    %c0_24 = arith.constant 0 : index
    %c0_25 = arith.constant 0 : index
    %c0_26 = arith.constant 0 : index
    %45 = vector.load %arg6[%c0_23, %c0_24, %c0_25, %c0_26] : memref<1x1x8x128xf32, #tpu.memory_space<vmem>>, vector<1x1x8x128xf32>
    %46 = vector.shape_cast %45 : vector<1x1x8x128xf32> to vector<8x128xf32>
    %47 = vector.shape_cast %44 : vector<8x128xf32> to vector<1x1x8x128xf32>
    tpu.vector_store %arg6[%c0_23, %c0_24, %c0_25, %c0_26], %47 {strides = array<i32>} : memref<1x1x8x128xf32, #tpu.memory_space<vmem>>, vector<1x1x8x128xf32>,
    return
  }
  func.func @transform_0(%arg0: i32, %arg1: i32, %arg2: i32) -> (i32, i32, i32) {
    %c1_i32 = arith.constant 1 : i32
    %0 = arith.muli %arg1, %c1_i32 : i32
    %1 = arith.addi %0, %arg2 : i32
    %c0_i32 = arith.constant 0 : i32
    %c0_i32_0 = arith.constant 0 : i32
    return %arg0, %c0_i32, %1 : i32, i32, i32
  }
  func.func @transform_1(%arg0: i32, %arg1: i32, %arg2: i32) -> (i32, i32, i32) {
    %c1_i32 = arith.constant 1 : i32
    %0 = arith.muli %arg1, %c1_i32 : i32
    %1 = arith.addi %0, %arg2 : i32
    %c0_i32 = arith.constant 0 : i32
    %c0_i32_0 = arith.constant 0 : i32
    return %arg0, %c0_i32, %1 : i32, i32, i32
  }
  func.func @transform_2(%arg0: i32, %arg1: i32, %arg2: i32) -> (i32, i32, i32, i32) {
    %c0_i32 = arith.constant 0 : i32
    %c0_i32_0 = arith.constant 0 : i32
    %c0_i32_1 = arith.constant 0 : i32
    return %arg0, %arg1, %c0_i32, %c0_i32_0 : i32, i32, i32, i32
  }
  func.func @transform_3(%arg0: i32, %arg1: i32, %arg2: i32) -> (i32, i32, i32, i32) {
    %c0_i32 = arith.constant 0 : i32
    %c0_i32_0 = arith.constant 0 : i32
    %c0_i32_1 = arith.constant 0 : i32
    return %arg0, %arg1, %c0_i32, %c0_i32_0 : i32, i32, i32, i32
  }
}

</mosaic_0001>

<llo_original>
// kernel: tpu_custom_call.1
$region0: #{tpu_custom_call.1}
  #allocation0 [shape = 'u32[]', space=smem, size = 0x4, offset = 0x4, fixed_abs, tag = 'smem constant byte address 0x4 - core index']
  #allocation1 [shape = 'u32[144,128]{1,0:T(1,128)}', space=vmem, size = 0x12000, scoped, tag = 'internal scratch']
  %s0 = inlined_call_operand.vmem [shape: f32[2,7,256], index: 0, kind: input, shape index: {}]
  %s1 = inlined_call_operand.vmem [shape: s32[2,1,256], index: 1, kind: input, shape index: {}]
  %s2 = inlined_call_operand.hbm [shape: f32[2,2,8,128], index: 2, kind: output, shape index: {0}]
  %s3 = inlined_call_operand.hbm [shape: f32[2,2,8,128], index: 3, kind: output, shape index: {1}]
  %4 = xla_tuple %s2, %s3
  %s5 = sld [smem:[#allocation0]]
  $region53: #{tpu_custom_call.1} parent=0
    _
  %s7 = ssub.s32 1, %s5
  %s8 = scalar_select 0, %s7, %s5
  $region1: #{tpu_custom_call.1} parent=0
    #allocation2 [shape = 'u8[8192]{0}', space=vmem, size = 0x2000, scoped, tag = 'output window, operand 0']
    #allocation3 [shape = 's32[2]{0}', space=sflag, size = 0x8, scoped, tag = 'scoped memory for tpu_custom_call.1']
    #allocation4 [shape = 'u8[8192]{0}', space=vmem, size = 0x2000, scoped, tag = 'output window, operand 1']
    #allocation5 [shape = 's32[2]{0}', space=sflag, size = 0x8, scoped, tag = 'scoped memory for tpu_custom_call.1']
    %9 = vsyncpa [#allocation3], 0
    %s10 = scalar_lea.sflag [#allocation3], 1
    %11 = vsyncpa %s10, 0
    %12 = vsyncpa [#allocation5], 0
    %s13 = scalar_lea.sflag [#allocation5], 1
    %14 = vsyncpa %s13, 0
    loop: start=0, step=1, limit=6
    $region2: #{tpu_custom_call.1} parent=1 // loop_pre_header
      _
    $region3: #{tpu_custom_call.1} parent=1 // loop_header
      %s16 = sphi 0, %s20
      %p17 = scmp.ge.s32.totalorder %s16, 6
      %s23 = sphi 0, %s42
      %s24 = sphi 0, %s38
      %s25 = sphi 0, %s34
      %s26 = sphi 0, %s23
      %s27 = sphi 0, %s24
      %s28 = sphi 0, %s25
      %s29 = sphi 0, %s26
      %s30 = sphi 0, %s27
      %s31 = sphi 0, %s28
      %s49 = sphi 0, %s51
      %s52 = sphi 0, %s49
      %s53 = sphi 0, %s52
      %s69 = sphi 0, %s53
      %s79 = sphi 0, %s81
      %s82 = sphi 0, %s79
      %s83 = sphi 0, %s82
      %s99 = sphi 0, %s83
      %s107 = sphi 0, %s109
      %s110 = sphi 0, %s107
      %s111 = sphi 0, %s110
      %s127 = sphi 0, %s111
      %s135 = sphi 0, %s137
      %s138 = sphi 0, %s135
      %s139 = sphi 0, %s138
      %s155 = sphi 0, %s139
    $region4: #{tpu_custom_call.1} parent=1 // loop_header_branch
      %19 = sbr.rel (%p17) target = $region8
    $region5: #{tpu_custom_call.1} parent=1 // loop_body
      %s21 = ssub.s32 %s16, 1
      %s22 = ssub.s32 %s16, 2
      %s32 = sadd.s32 1, %s25
      %p33 = scmp.ge.s32.totalorder %s32, 1
      %s34 = scalar_select %p33, 0, %s32
      %s35 = sadd.s32 1, %s24
      %s36 = scalar_select %p33, %s35, %s24
      %p37 = scmp.ge.s32.totalorder %s36, 2
      %s38 = scalar_select %p37, 0, %s36
      %s39 = sadd.s32 1, %s23
      %s40 = scalar_select %p37, %s39, %s23
      %p41 = scmp.ge.s32.totalorder %s40, 2
      %s42 = scalar_select %p41, 0, %s40
      %s43 = sadd.s32 %s24, %s25
      %s44 = sadd.s32 %s38, %s34
      %s45 = ssub.s32 %s23, %s42
      %s46 = ssub.s32 %s43, %s44
      %s47 = sor.u32 %s45, %s46
      %p48 = scmp.eq.s32.totalorder %s47, 0
      %s50 = sadd.s32 %s49, 1
      %s51 = scalar_select %p48, %s49, %s50
      %p54 = pneg %p48
      %p55 = scmp.eq.s32.totalorder %s16, 3
      %p56 = por %p54, %p55
      %p57 = scmp.ne.s32.totalorder %s49, %s52
      %p58 = scmp.eq.s32.totalorder %s16, 0
      %p59 = por %p57, %p58
      %p60 = scmp.ne.s32.totalorder %s49, %s52
      %p61 = scmp.eq.s32.totalorder %s21, 3
      %p62 = por %p60, %p61
      %p63 = scmp.ne.s32.totalorder %s52, %s53
      %p64 = scmp.eq.s32.totalorder %s21, 0
      %p65 = por %p63, %p64
      %p66 = scmp.ne.s32.totalorder %s52, %s53
      %p67 = scmp.eq.s32.totalorder %s22, 3
      %p68 = por %p66, %p67
      %p70 = scmp.ne.s32.totalorder %s53, %s69
      %p71 = scmp.eq.s32.totalorder %s22, 0
      %p72 = por %p70, %p71
      %s73 = sadd.s32 %s24, %s25
      %s74 = sadd.s32 %s38, %s34
      %s75 = ssub.s32 %s23, %s42
      %s76 = ssub.s32 %s73, %s74
      %s77 = sor.u32 %s75, %s76
      %p78 = scmp.eq.s32.totalorder %s77, 0
      %s80 = sadd.s32 %s79, 1
      %s81 = scalar_select %p78, %s79, %s80
      %p84 = pneg %p78
      %p85 = scmp.eq.s32.totalorder %s16, 3
      %p86 = por %p84, %p85
      %p87 = scmp.ne.s32.totalorder %s79, %s82
      %p88 = scmp.eq.s32.totalorder %s16, 0
      %p89 = por %p87, %p88
      %p90 = scmp.ne.s32.totalorder %s79, %s82
      %p91 = scmp.eq.s32.totalorder %s21, 3
      %p92 = por %p90, %p91
      %p93 = scmp.ne.s32.totalorder %s82, %s83
      %p94 = scmp.eq.s32.totalorder %s21, 0
      %p95 = por %p93, %p94
      %p96 = scmp.ne.s32.totalorder %s82, %s83
      %p97 = scmp.eq.s32.totalorder %s22, 3
      %p98 = por %p96, %p97
      %p100 = scmp.ne.s32.totalorder %s83, %s99
      %p101 = scmp.eq.s32.totalorder %s22, 0
      %p102 = por %p100, %p101
      %s103 = ssub.s32 %s23, %s42
      %s104 = ssub.s32 %s24, %s38
      %s105 = sor.u32 %s103, %s104
      %p106 = scmp.eq.s32.totalorder %s105, 0
      %s108 = sadd.s32 %s107, 1
      %s109 = scalar_select %p106, %s107, %s108
      %p112 = pneg %p106
      %p113 = scmp.eq.s32.totalorder %s16, 3
      %p114 = por %p112, %p113
      %p115 = scmp.ne.s32.totalorder %s107, %s110
      %p116 = scmp.eq.s32.totalorder %s16, 0
      %p117 = por %p115, %p116
      %p118 = scmp.ne.s32.totalorder %s107, %s110
      %p119 = scmp.eq.s32.totalorder %s21, 3
      %p120 = por %p118, %p119
      %p121 = scmp.ne.s32.totalorder %s110, %s111
      %p122 = scmp.eq.s32.totalorder %s21, 0
      %p123 = por %p121, %p122
      %p124 = scmp.ne.s32.totalorder %s110, %s111
      %p125 = scmp.eq.s32.totalorder %s22, 3
      %p126 = por %p124, %p125
      %p128 = scmp.ne.s32.totalorder %s111, %s127
      %p129 = scmp.eq.s32.totalorder %s22, 0
      %p130 = por %p128, %p129
      %s131 = ssub.s32 %s23, %s42
      %s132 = ssub.s32 %s24, %s38
      %s133 = sor.u32 %s131, %s132
      %p134 = scmp.eq.s32.totalorder %s133, 0
      %s136 = sadd.s32 %s135, 1
      %s137 = scalar_select %p134, %s135, %s136
      %p140 = pneg %p134
      %p141 = scmp.eq.s32.totalorder %s16, 3
      %p142 = por %p140, %p141
      %p143 = scmp.ne.s32.totalorder %s135, %s138
      %p144 = scmp.eq.s32.totalorder %s16, 0
      %p145 = por %p143, %p144
      %p146 = scmp.ne.s32.totalorder %s135, %s138
      %p147 = scmp.eq.s32.totalorder %s21, 3
      %p148 = por %p146, %p147
      %p149 = scmp.ne.s32.totalorder %s138, %s139
      %p150 = scmp.eq.s32.totalorder %s21, 0
      %p151 = por %p149, %p150
      %p152 = scmp.ne.s32.totalorder %s138, %s139
      %p153 = scmp.eq.s32.totalorder %s22, 3
      %p154 = por %p152, %p153
      %p156 = scmp.ne.s32.totalorder %s139, %s155
      %p157 = scmp.eq.s32.totalorder %s22, 0
      %p158 = por %p156, %p157
      %p159 = scmp.le.s32.totalorder 1, %s16
      %p160 = scmp.lt.s32.totalorder %s16, 5
      %p161 = pnand %p159, %p160
      %p162 = pneg %p161
      // Predicated region
      $region9: #{tpu_custom_call.1} parent=5 // pred_check
        _
      $region10: #{tpu_custom_call.1} parent=5 // pred_check_branch
        %164 = sbr.rel (%p161) target = $region12
      $region11: #{tpu_custom_call.1} parent=5 // pred_region
        %s165 = ssub.s32 %s16, 1
      $region12: #{tpu_custom_call.1} parent=5 // pred_fallthru
        _
      %p166 = scmp.lt.s32.totalorder %s16, 4
      // Predicated region
      $region13: #{tpu_custom_call.1} parent=5 // pred_check
        %p167 = pneg %p166
      $region14: #{tpu_custom_call.1} parent=5 // pred_check_branch
        %169 = sbr.rel (%p167) target = $region16
      $region15: #{tpu_custom_call.1} parent=5 // pred_region
        // Predicated region
        $region17: #{tpu_custom_call.1} parent=15 // pred_check
          %p170 = pneg %p59
        $region18: #{tpu_custom_call.1} parent=15 // pred_check_branch
          %172 = sbr.rel (%p170) target = $region20
        $region19: #{tpu_custom_call.1} parent=15 // pred_region
          %s173 = sadd.s32 %s24, %s25
          %p174 = scmp.lt.s32.totalorder %s23, 1
          %s175 = scalar_select %p174, %s23, 1
          %p176 = scmp.lt.s32.totalorder %s173, 1
          %s177 = scalar_select %p176, %s173, 1
          %s178 = smul.addr %s175, 2
          %s179 = sadd.s32 %s177, %s178
          %s180 = smul.addr %s179, 8
          %s181 = scalar_lea.vmem %s0, %s180
          %s182 = sadd.s32 %s24, %s25
        $region20: #{tpu_custom_call.1} parent=15 // pred_fallthru
          _
        // Predicated region
        $region21: #{tpu_custom_call.1} parent=15 // pred_check
          %p183 = pneg %p89
        $region22: #{tpu_custom_call.1} parent=15 // pred_check_branch
          %185 = sbr.rel (%p183) target = $region24
        $region23: #{tpu_custom_call.1} parent=15 // pred_region
          %s186 = sadd.s32 %s24, %s25
          %p187 = scmp.lt.s32.totalorder %s23, 1
          %s188 = scalar_select %p187, %s23, 1
          %p189 = scmp.lt.s32.totalorder %s186, 1
          %s190 = scalar_select %p189, %s186, 1
          %s191 = smul.addr %s188, 2
          %s192 = sadd.s32 %s190, %s191
          %s193 = scalar_lea.vmem %s1, %s192
          %s194 = sadd.s32 %s24, %s25
        $region24: #{tpu_custom_call.1} parent=15 // pred_fallthru
          _
      $region16: #{tpu_custom_call.1} parent=5 // pred_fallthru
        _
      %p195 = scmp.le.s32.totalorder 1, %s16
      %p196 = scmp.lt.s32.totalorder %s16, 5
      %p197 = pnand %p195, %p196
      %p198 = pneg %p197
      // Predicated region
      $region25: #{tpu_custom_call.1} parent=5 // pred_check
        _
      $region26: #{tpu_custom_call.1} parent=5 // pred_check_branch
        %200 = sbr.rel (%p197) target = $region28
      $region27: #{tpu_custom_call.1} parent=5 // pred_region
        %s201 = ssub.s32 %s16, 1
        %s202 = sadd.s32 %s27, %s28
        %p203 = scmp.lt.s32.totalorder %s26, 1
        %s204 = scalar_select %p203, %s26, 1
        %p205 = scmp.lt.s32.totalorder %s202, 1
        %s206 = scalar_select %p205, %s202, 1
        %s207 = smul.addr %s204, 2
        %s208 = sadd.s32 %s206, %s207
        %s209 = smul.addr %s208, 8
        %s210 = scalar_lea.vmem %s0, %s209
        %p211 = pneg %p65
        %p212 = pneg %p62
        %s213 = sadd.s32 %s27, %s28
        %p214 = scmp.lt.s32.totalorder %s26, 1
        %s215 = scalar_select %p214, %s26, 1
        %p216 = scmp.lt.s32.totalorder %s213, 1
        %s217 = scalar_select %p216, %s213, 1
        %s218 = smul.addr %s215, 2
        %s219 = sadd.s32 %s217, %s218
        %s220 = scalar_lea.vmem %s1, %s219
        %p221 = pneg %p95
        %p222 = pneg %p92
        %p223 = pneg %p123
        %p224 = pneg %p120
        %s225 = sand.u32 %s110, 1
        %s226 = scalar_lea.sflag [#allocation3], %s225
        %s227 = sand.u32 %s110, 1
        %s228 = smul.addr %s227, 8
        %s229 = scalar_lea.vmem [#allocation2], %s228
        %p230 = pneg %p151
        %p231 = pneg %p148
        %s232 = sand.u32 %s138, 1
        %s233 = scalar_lea.sflag [#allocation5], %s232
        %s234 = sand.u32 %s138, 1
        %s235 = smul.addr %s234, 8
        %s236 = scalar_lea.vmem [#allocation4], %s235
        %s237 = sadd.s32 %s27, %s28
        %p238 = scmp.lt.s32.totalorder %s26, 1
        %s239 = scalar_select %p238, %s26, 1
        %p240 = scmp.lt.s32.totalorder %s237, 1
        %s241 = scalar_select %p240, %s237, 1
        %s242 = smul.addr %s239, 2
        %s243 = sadd.s32 %s241, %s242
        %s244 = smul.addr %s243, 8
        %s245 = scalar_lea.vmem %s0, %s244
        %s246 = sadd.s32 %s27, %s28
        %s247 = sadd.s32 %s27, %s28
        %p248 = scmp.lt.s32.totalorder %s26, 1
        %s249 = scalar_select %p248, %s26, 1
        %p250 = scmp.lt.s32.totalorder %s247, 1
        %s251 = scalar_select %p250, %s247, 1
        %s252 = smul.addr %s249, 2
        %s253 = sadd.s32 %s251, %s252
        %s254 = scalar_lea.vmem %s1, %s253
        %s255 = sadd.s32 %s27, %s28
        %p256 = scmp.eq.s32.totalorder %s28, 0
        // Predicated region
        $region29: #{tpu_custom_call.1} parent=27 // pred_check
          %p257 = pneg %p256
        $region30: #{tpu_custom_call.1} parent=27 // pred_check_branch
          %259 = sbr.rel (%p257) target = $region32
        $region31: #{tpu_custom_call.1} parent=27 // pred_region
          %260 = vst [vmem:[%s229] sm:$0xff] 0.0
          %261 = vst [vmem:[%s236] sm:$0xff] 0.0
        $region32: #{tpu_custom_call.1} parent=27 // pred_fallthru
          _
        %v262 = vld [vmem:[%s245] sm:$0x7f]
        %v263 = vld [vmem:[%s254] sm:$0x1]
        %vm264 = vcmask 1046528
        %v265 = vsel %vm264, %v262, -inf
        %v266 = vrot.slane %v265, 4
        %v267 = vmax.f32 %v265, %v266
        %v268 = vrot.slane %v267, 2
        %v269 = vmax.f32 %v267, %v268
        %v270 = vrot.slane %v269, 1
        %v271 = vmax.f32 %v269, %v270
        %v272 = vsub.f32 %v262, %v271
        %v273 = vmul.f32 %v272, 1.442695
        %v274 = vpow.pop %v273
        %v275 = vsel %vm264, %v274, 0.0
        %v276 = vrot.slane %v275, 4
        %v277 = vadd.f32 %v275, %v276
        %v278 = vrot.slane %v277, 2
        %v279 = vadd.f32 %v277, %v278
        %v280 = vrot.slane %v279, 1
        %v281 = vadd.f32 %v279, %v280
        %v282 = vlog2.pop %v281
        %v283 = vmul.f32 %v282, 0.6931472
        %v284 = vlaneseq
        %v285 = vshrl.u32 %v284, 7
        %v286 = vlaneseq
        %v287 = vshrl.u32 %v286, 7
        %v288 = vsub.s32 0, %v287
        %v289 = vrot.slane %v263, %v288
        %vm290 = vcmp.eq.s32.totalorder %v285, %v289
        %v291 = vsel %vm290, %v272, 0.0
        %v292 = vsel %vm264, %v291, 0.0
        %v293 = vrot.slane %v292, 4
        %v294 = vadd.f32 %v292, %v293
        %v295 = vrot.slane %v294, 2
        %v296 = vadd.f32 %v294, %v295
        %v297 = vrot.slane %v296, 1
        %v298 = vadd.f32 %v296, %v297
        %v299 = vsub.f32 %v298, %v283
        %vm300 = vcmp.ne.s32.totalorder %v263, 6
        %v301 = vsel %vm300, 1, 0
        %v302 = vcvt.s32.f32 %v301
        %v303 = vmul.f32 %v299, %v302
        %vm304 = vcmask 1040384
        %v305 = vsel %vm304, %v303, 0.0
        %306 = vadd.xlane.f32.xlu0 %v305
        %v307 = vpop.xlane.xlu0 %306
        %v308 = vsel %vm304, %v302, 0.0
        %309 = vadd.xlane.f32.xlu0 %v308
        %v310 = vpop.xlane.xlu0 %309
        %v311 = vld [vmem:[%s229] sm:$0xff]
        %v312 = vlaneseq
        %v313 = vshrl.u32 %v312, 7
        %v314 = vsub.s32 0, %v313
        %v315 = vrot.slane %v307, %v314
        %v316 = vadd.f32 %v311, %v315
        %317 = vst [vmem:[%s229] sm:$0xff] %v316
        %v318 = vld [vmem:[%s236] sm:$0xff]
        %v319 = vlaneseq
        %v320 = vshrl.u32 %v319, 7
        %v321 = vsub.s32 0, %v320
        %v322 = vrot.slane %v310, %v321
        %v323 = vadd.f32 %v318, %v322
        %324 = vst [vmem:[%s236] sm:$0xff] %v323
        %s325 = sand.u32 %s110, 1
        %s326 = scalar_lea.sflag [#allocation3], %s325
        %s327 = sand.u32 %s110, 1
        %s328 = smul.addr %s327, 8
        %s329 = scalar_lea.vmem [#allocation2], %s328
        %s330 = sand.u32 %s138, 1
        %s331 = scalar_lea.sflag [#allocation5], %s330
        %s332 = sand.u32 %s138, 1
        %s333 = smul.addr %s332, 8
        %s334 = scalar_lea.vmem [#allocation4], %s333
        // Predicated region
        $region33: #{tpu_custom_call.1} parent=27 // pred_check
          %p335 = pneg %p120
        $region34: #{tpu_custom_call.1} parent=27 // pred_check_branch
          %337 = sbr.rel (%p335) target = $region36
        $region35: #{tpu_custom_call.1} parent=27 // pred_region
          %s339 = ssub.s32 128, 128
          %340 = vsyncadd %s326, %s339
          %s341 = smul.addr %s26, 2
          %s342 = sadd.s32 %s27, %s341
          %s343 = smul.addr %s342, 128
          %s344 = scalar_lea.hbm %s2, %s343
          %s346 = sshll.u32 %s329, 4
          %s347 = int_to_ptr.vmem [resolvable:$true] %s346
          %349 = dma.vmem_to_hbm [thread:$0]  %s347, 128, %s344, %s326
        $region36: #{tpu_custom_call.1} parent=27 // pred_fallthru
          _
        // Predicated region
        $region37: #{tpu_custom_call.1} parent=27 // pred_check
          %p350 = pneg %p148
        $region38: #{tpu_custom_call.1} parent=27 // pred_check_branch
          %352 = sbr.rel (%p350) target = $region40
        $region39: #{tpu_custom_call.1} parent=27 // pred_region
          %s354 = ssub.s32 128, 128
          %355 = vsyncadd %s331, %s354
          %s356 = smul.addr %s26, 2
          %s357 = sadd.s32 %s27, %s356
          %s358 = smul.addr %s357, 128
          %s359 = scalar_lea.hbm %s3, %s358
          %s361 = sshll.u32 %s334, 4
          %s362 = int_to_ptr.vmem [resolvable:$true] %s361
          %364 = dma.vmem_to_hbm [thread:$0]  %s362, 128, %s359, %s331
        $region40: #{tpu_custom_call.1} parent=27 // pred_fallthru
          _
      $region28: #{tpu_custom_call.1} parent=5 // pred_fallthru
        _
      %p365 = scmp.le.s32.totalorder 2, %s16
      // Predicated region
      $region41: #{tpu_custom_call.1} parent=5 // pred_check
        %p366 = pneg %p365
      $region42: #{tpu_custom_call.1} parent=5 // pred_check_branch
        %368 = sbr.rel (%p366) target = $region44
      $region43: #{tpu_custom_call.1} parent=5 // pred_region
        %s369 = ssub.s32 %s16, 2
        // Predicated region
        $region45: #{tpu_custom_call.1} parent=43 // pred_check
          %p370 = pneg %p126
        $region46: #{tpu_custom_call.1} parent=43 // pred_check_branch
          %372 = sbr.rel (%p370) target = $region48
        $region47: #{tpu_custom_call.1} parent=43 // pred_region
          %s373 = sand.u32 %s111, 1
          %s374 = scalar_lea.sflag [#allocation3], %s373
          %s375 = sand.u32 %s111, 1
          %s376 = smul.addr %s375, 8
          %s377 = scalar_lea.vmem [#allocation2], %s376
          %378 = dma.done %s374, 128
        $region48: #{tpu_custom_call.1} parent=43 // pred_fallthru
          _
        // Predicated region
        $region49: #{tpu_custom_call.1} parent=43 // pred_check
          %p379 = pneg %p154
        $region50: #{tpu_custom_call.1} parent=43 // pred_check_branch
          %381 = sbr.rel (%p379) target = $region52
        $region51: #{tpu_custom_call.1} parent=43 // pred_region
          %s382 = sand.u32 %s139, 1
          %s383 = scalar_lea.sflag [#allocation5], %s382
          %s384 = sand.u32 %s139, 1
          %s385 = smul.addr %s384, 8
          %s386 = scalar_lea.vmem [#allocation4], %s385
          %387 = dma.done %s383, 128
        $region52: #{tpu_custom_call.1} parent=43 // pred_fallthru
          _
      $region44: #{tpu_custom_call.1} parent=5 // pred_fallthru
        _
    $region6: #{tpu_custom_call.1} parent=1 // loop_footer
      %s20 = sadd.s32 1, %s16
    $region7: #{tpu_custom_call.1} parent=1 // loop_footer_branch
      %15 = sbr.rel target = $region3
    $region8: #{tpu_custom_call.1} parent=1 // loop_exit
      _
    %388 = vsyncpa [#allocation3], 1
    %s389 = scalar_lea.sflag [#allocation3], 1
    %390 = vsyncpa %s389, 1
    %391 = vsyncpa [#allocation5], 1
    %s392 = scalar_lea.sflag [#allocation5], 1
    %393 = vsyncpa %s392, 1

</llo_original>
